<compile_context>
chip_gen: v5e
topology: v5e:2x2
jax: 0.10.0
libtpu: 0.0.40
codegen_flags: <defaults>
</compile_context>

<pallas_src>
import functools
from dataclasses import dataclass

import jax
import jax.numpy as jnp
from jax import lax
from jax.experimental import pallas as pl
from jax.experimental.pallas import tpu as pltpu


# ----------------------------------------------------------------------------
# Fused Pallas kernel: last-token MLP body + vocab-tiled lm_head matmul +
# running argmax + temperature scaling + Gumbel-max sampling.
# ----------------------------------------------------------------------------
def _fused_sample_kernel(x_ref, w1_ref, b1_ref, lm_ref, t_ref, g_ref,
                         out_ref,
                         hidden_sc, maxv_sc, argid_sc, gmaxv_sc, gidx_sc,
                         *, tv):
    v = pl.program_id(1)

    @pl.when(v == 0)
    def _init():
        # hidden = relu(x_sel @ W1 + b1): computed once per batch-row tile and
        # kept resident in VMEM scratch (bf16 MXU operand) across vocab tiles.
        h = jnp.dot(x_ref[...], w1_ref[...],
                    preferred_element_type=jnp.float32)
        h = jnp.maximum(h + b1_ref[...], 0.0)
        hidden_sc[...] = h.astype(hidden_sc.dtype)
        maxv_sc[...] = jnp.full(maxv_sc.shape, -jnp.inf, jnp.float32)
        argid_sc[...] = jnp.zeros(argid_sc.shape, jnp.float32)
        gmaxv_sc[...] = jnp.full(gmaxv_sc.shape, -jnp.inf, jnp.float32)
        gidx_sc[...] = jnp.zeros(gidx_sc.shape, jnp.float32)

    # logits tile (TB, TV): bf16 x bf16 on the MXU, f32 accumulate
    logits = jnp.dot(hidden_sc[...], lm_ref[...],
                     preferred_element_type=jnp.float32)

    # global vocab index for each lane of this tile (f32: exact for V < 2^24)
    col = (lax.broadcasted_iota(jnp.int32, logits.shape, 1)
           + v * tv).astype(jnp.float32)
    sentinel = jnp.float32(1e9)

    # running argmax across vocab tiles (strict '>' keeps first-max semantics)
    tile_max = jnp.max(logits, axis=-1, keepdims=True)                  # (TB,1)
    tile_arg = jnp.min(jnp.where(logits == tile_max, col, sentinel),
                       axis=-1, keepdims=True)                          # (TB,1)
    upd = tile_max > maxv_sc[...]
    argid_sc[...] = jnp.where(upd, tile_arg, argid_sc[...])
    maxv_sc[...] = jnp.where(upd, tile_max, maxv_sc[...])

    # temperature scaling in f32. No softmax needed: Gumbel-max is invariant
    # to the per-row log-sum-exp constant.
    t = t_ref[...]                                                       # (TB,1)
    scaled = logits / jnp.where(t != 0.0, t, 1.0)                        # (TB,TV)

    # All num_samples Gumbel-max draws processed at once for this vocab tile.
    scores = scaled[:, None, :] + g_ref[...]                         # (TB,NS,TV)
    s_max = jnp.max(scores, axis=-1, keepdims=True)                  # (TB,NS,1)
    s_arg = jnp.min(jnp.where(scores == s_max, col[:, None, :], sentinel),
                    axis=-1, keepdims=True)                          # (TB,NS,1)
    s_upd = s_max > gmaxv_sc[...]
    gidx_sc[...] = jnp.where(s_upd, s_arg, gidx_sc[...])
    gmaxv_sc[...] = jnp.where(s_upd, s_max, gmaxv_sc[...])

    @pl.when(v == pl.num_programs(1) - 1)
    def _finalize():
        greedy = argid_sc[...][:, :, None]      # (TB,1,1)
        t3 = t_ref[...][:, :, None]             # (TB,1,1)
        next_ids = jnp.where(t3 != 0.0, gidx_sc[...], greedy)  # (TB,NS,1)
        out_ref[...] = next_ids.astype(jnp.int32)               # single store


def fused_logits_and_sample(x_sel, w1, b1, lm_head, t, gumbel, *, tb=8, tv=256):
    b_pad, e = x_sel.shape
    h, v_total = lm_head.shape
    ns = gumbel.shape[1]
    assert b_pad % tb == 0 and v_total % tv == 0
    grid = (b_pad // tb, v_total // tv)

    kernel = functools.partial(_fused_sample_kernel, tv=tv)
    out = pl.pallas_call(
        kernel,
        out_shape=jax.ShapeDtypeStruct((b_pad, ns, 1), jnp.int32),
        grid_spec=pltpu.PrefetchScalarGridSpec(
            num_scalar_prefetch=0,
            grid=grid,
            in_specs=[
                pl.BlockSpec((tb, e), lambda b, v: (b, 0)),          # x_sel
                pl.BlockSpec((e, h), lambda b, v: (0, 0)),           # w1
                pl.BlockSpec((1, h), lambda b, v: (0, 0)),           # b1
                pl.BlockSpec((h, tv), lambda b, v: (0, v)),          # lm_head tile
                pl.BlockSpec((tb, 1), lambda b, v: (b, 0)),          # t
                pl.BlockSpec((tb, ns, tv), lambda b, v: (b, 0, v)),  # gumbel tile
            ],
            out_specs=pl.BlockSpec((tb, ns, 1), lambda b, v: (b, 0, 0)),
            scratch_shapes=[
                pltpu.VMEM((tb, h), jnp.bfloat16),       # hidden (resident)
                pltpu.VMEM((tb, 1), jnp.float32),        # running logits max
                pltpu.VMEM((tb, 1), jnp.float32),        # running argmax id
                pltpu.VMEM((tb, ns, 1), jnp.float32),    # running gumbel max
                pltpu.VMEM((tb, ns, 1), jnp.float32),    # running sampled id
            ]),
        compiler_params=pltpu.CompilerParams(
            dimension_semantics=("parallel", "arbitrary"),
            vmem_limit_bytes=64 * 1024 * 1024),
    )(x_sel, w1, b1, lm_head, t, gumbel)
    return out[:, :, 0]


# ----------------------------------------------------------------------------
# Glue: attention metadata, slot-mapping arithmetic, full ModelWrapper.forward
# ----------------------------------------------------------------------------
@dataclass
class AttentionMetadata:
    num_prefills: int
    slot_mapping: jnp.ndarray  # [B, S] int32


def _transform_slot_mapping(slot_mapping, num_kv_heads, num_blocks, block_size):
    # Mirrors the per-head slot-offset expansion in ModelWrapper.forward.
    sm = slot_mapping.reshape(-1)
    head_ind = jnp.arange(num_kv_heads, dtype=sm.dtype) * (block_size * num_blocks)
    sm = jnp.repeat(sm, num_kv_heads).reshape(-1, num_kv_heads)
    sm = sm + head_ind[None, :]
    return sm.reshape(-1)


def model_wrapper_forward(params, token_ids, position_ids, attn_metadata,
                          input_lens, t, p, num_samples, kv_caches, seed=0):
    del p  # _ENABLE_TOP_P = False in the reference module
    batch_size, seq_len = token_ids.shape

    # logits_indices = arange(B)*S + input_lens - 1   (reference glue)
    start_indices = jnp.arange(batch_size, dtype=jnp.int32) * seq_len
    logits_indices = start_indices + input_lens - 1

    # KV-cache slot-mapping expansion (index arithmetic only in the reference)
    if kv_caches[0][0] is not None:
        num_kv_heads, num_blocks, block_size, _ = kv_caches[0][0].shape
        attn_metadata.slot_mapping = _transform_slot_mapping(
            attn_metadata.slot_mapping, num_kv_heads, num_blocks, block_size)

    # --- synthetic model body restricted to the last-token rows ---
    # TODO(synk): a real self.model would also write the KV cache for all B*S
    # tokens; the synthetic body has no cache side effects, so the W1 matmul is
    # fused into the sampling kernel and run only on the B last-token rows.
    flat_tok = token_ids.reshape(-1)[logits_indices]
    flat_pos = position_ids.reshape(-1)[logits_indices]
    x_sel = params["tok_emb"][flat_tok] + params["pos_emb"][flat_pos]  # (B,E) f32

    # pad batch rows to a full sublane tile and cast MXU operands to bf16
    tb = 8
    b_pad = ((batch_size + tb - 1) // tb) * tb
    pad = b_pad - batch_size
    x_sel = jnp.pad(x_sel, ((0, pad), (0, 0))).astype(jnp.bfloat16)
    t_pad = jnp.pad(t.astype(jnp.float32), (0, pad),
                    constant_values=1.0).reshape(b_pad, 1)

    # TODO(synk): at production vocab sizes the Gumbel noise should be drawn
    # in-kernel (pltpu.prng_random_bits with per-vocab-tile offsets) instead of
    # being precomputed; host-side jax.random noise is used here so the kernel
    # contains no TPU-only PRNG primitives and also runs under interpret mode.
    v_total = params["lm_head"].shape[1]
    gumbel = jax.random.gumbel(jax.random.PRNGKey(seed),
                               (b_pad, num_samples, v_total), jnp.float32)

    tv = min(256, v_total)
    next_token_ids = fused_logits_and_sample(
        x_sel, params["w1"], params["b1"], params["lm_head"],
        t_pad, gumbel, tb=tb, tv=tv)
    return next_token_ids[:batch_size]


# ----------------------------------------------------------------------------
# Main
# ----------------------------------------------------------------------------
if __name__ == "__main__":
    B, S = 2, 8            # batch, seq_len
    E, H, V = 128, 128, 512  # lane-aligned embed dim, hidden dim, vocab
    MAX_POS = 64
    NUM_SAMPLES = 4
    NUM_KV_HEADS, NUM_BLOCKS, BLOCK_SIZE, HEAD_DIM = 2, 4, 8, 16

    key = jax.random.PRNGKey(0)
    k1, k2, k3, k4, k5, k6 = jax.random.split(key, 6)

    params = {
        "tok_emb": jax.random.normal(k1, (V, E), jnp.float32) * 0.1,
        "pos_emb": jax.random.normal(k2, (MAX_POS, E), jnp.float32) * 0.1,
        "w1": (jax.random.normal(k3, (E, H), jnp.float32) * 0.1).astype(jnp.bfloat16),
        "b1": jnp.zeros((1, H), jnp.float32),
        "lm_head": (jax.random.normal(k4, (H, V), jnp.float32) * 0.1).astype(jnp.bfloat16),
    }

    token_ids = jax.random.randint(k5, (B, S), 0, V, dtype=jnp.int32)
    position_ids = jnp.broadcast_to(jnp.arange(S, dtype=jnp.int32), (B, S))
    input_lens = jnp.array([5, 8], dtype=jnp.int32)
    t = jnp.array([0.0, 0.7], dtype=jnp.float32)   # row 0 greedy, row 1 sampled
    p = jnp.array([1.0, 0.9], dtype=jnp.float32)   # unused (_ENABLE_TOP_P=False)

    slot_mapping = jax.random.randint(
        k6, (B, S), 0, NUM_BLOCKS * BLOCK_SIZE, dtype=jnp.int32)
    attn_metadata = AttentionMetadata(num_prefills=B, slot_mapping=slot_mapping)

    kv_caches = [(
        jnp.zeros((NUM_KV_HEADS, NUM_BLOCKS, BLOCK_SIZE, HEAD_DIM), jnp.float32),
        jnp.zeros((NUM_KV_HEADS, NUM_BLOCKS, BLOCK_SIZE, HEAD_DIM), jnp.float32),
    )]

    next_token_ids = model_wrapper_forward(
        params, token_ids, position_ids, attn_metadata,
        input_lens, t, p, NUM_SAMPLES, kv_caches, seed=0)
    next_token_ids = jax.block_until_ready(next_token_ids)

    assert next_token_ids.shape == (B, NUM_SAMPLES)
    assert next_token_ids.dtype == jnp.int32
    # greedy row (t == 0): every sample column must equal the argmax token
    assert bool(jnp.all(next_token_ids[0] == next_token_ids[0, 0]))
    print("KERNEL_OK")
</pallas_src>

<mosaic_0001>
module attributes {stable_mosaic.version = 11 : i64} {
  func.func @_fused_sample_kernel(%arg0: i32, %arg1: i32, %arg2: memref<8x128xbf16, #tpu.memory_space<vmem>>, %arg3: memref<128x128xbf16, #tpu.memory_space<vmem>>, %arg4: memref<1x128xf32, #tpu.memory_space<vmem>>, %arg5: memref<128x256xbf16, #tpu.memory_space<vmem>>, %arg6: memref<8x1xf32, #tpu.memory_space<vmem>>, %arg7: memref<8x4x256xf32, #tpu.memory_space<vmem>>, %arg8: memref<8x4x1xi32, #tpu.memory_space<vmem>>, %arg9: memref<8x128xbf16, #tpu.memory_space<vmem>>, %arg10: memref<8x1xf32, #tpu.memory_space<vmem>>, %arg11: memref<8x1xf32, #tpu.memory_space<vmem>>, %arg12: memref<8x4x1xf32, #tpu.memory_space<vmem>>, %arg13: memref<8x4x1xf32, #tpu.memory_space<vmem>>) attributes {dimension_semantics = [#tpu.dimension_semantics<parallel>, #tpu.dimension_semantics<arbitrary>], iteration_bounds = array<i64: 1, 2>, scalar_prefetch = 0 : i64, scratch_operands = 5 : i64, tpu.core_type = #tpu.core_type<tc>, window_params = [{transform_indices = @transform_0, window_bounds = array<i64: 8, 128>}, {pipeline_mode = #tpu.pipeline_mode<synchronous>, transform_indices = @transform_1, window_bounds = array<i64: 128, 128>}, {pipeline_mode = #tpu.pipeline_mode<synchronous>, transform_indices = @transform_2, window_bounds = array<i64: 1, 128>}, {transform_indices = @transform_3, window_bounds = array<i64: 128, 256>}, {transform_indices = @transform_4, window_bounds = array<i64: 8, 1>}, {transform_indices = @transform_5, window_bounds = array<i64: 8, 4, 256>}, {transform_indices = @transform_6, window_bounds = array<i64: 8, 4, 1>}]} {
    %c0_i32 = arith.constant 0 : i32
    %0 = arith.cmpi eq, %arg1, %c0_i32 : i32
    %1 = arith.extui %0 : i1 to i32
    %c0_i32_0 = arith.constant 0 : i32
    %2 = arith.cmpi ne, %1, %c0_i32_0 : i32
    scf.if %2 {
      %c0_43 = arith.constant 0 : index
      %c0_44 = arith.constant 0 : index
      %60 = vector.load %arg2[%c0_43, %c0_44] : memref<8x128xbf16, #tpu.memory_space<vmem>>, vector<8x128xbf16>
      %c0_45 = arith.constant 0 : index
      %c0_46 = arith.constant 0 : index
      %61 = vector.load %arg3[%c0_45, %c0_46] : memref<128x128xbf16, #tpu.memory_space<vmem>>, vector<128x128xbf16>
      %cst_47 = arith.constant dense<0.000000e+00> : vector<8x128xf32>
      %62 = tpu.matmul %60, %61, %cst_47 {dimension_numbers = #tpu.dot_dimension_numbers<[1], [0], [0], [1], [0, 0, 1, 1], [], []>} : vector<8x128xbf16>, vector<128x128xbf16>, vector<8x128xf32> -> vector<8x128xf32>
      %c0_48 = arith.constant 0 : index
      %c0_49 = arith.constant 0 : index
      %63 = vector.load %arg4[%c0_48, %c0_49] : memref<1x128xf32, #tpu.memory_space<vmem>>, vector<1x128xf32>
      %64 = vector.broadcast %63 : vector<1x128xf32> to vector<8x128xf32>
      %65 = arith.addf %62, %64 : vector<8x128xf32>
      %cst_50 = arith.constant 0.000000e+00 : f32
      %66 = vector.broadcast %cst_50 : f32 to vector<8x128xf32>
      %67 = arith.maximumf %65, %66 : vector<8x128xf32>
      %68 = arith.truncf %67 : vector<8x128xf32> to vector<8x128xbf16>
      %c0_51 = arith.constant 0 : index
      %c0_52 = arith.constant 0 : index
      %69 = vector.load %arg9[%c0_51, %c0_52] : memref<8x128xbf16, #tpu.memory_space<vmem>>, vector<8x128xbf16>
      tpu.vector_store %arg9[%c0_51, %c0_52], %68 {strides = array<i32>} : memref<8x128xbf16, #tpu.memory_space<vmem>>, vector<8x128xbf16>,
      %cst_53 = arith.constant 0xFF800000 : f32
      %70 = vector.broadcast %cst_53 : f32 to vector<8x1xf32>
      %c0_54 = arith.constant 0 : index
      %c0_55 = arith.constant 0 : index
      %71 = vector.load %arg10[%c0_54, %c0_55] : memref<8x1xf32, #tpu.memory_space<vmem>>, vector<8x1xf32>
      tpu.vector_store %arg10[%c0_54, %c0_55], %70 {strides = array<i32>} : memref<8x1xf32, #tpu.memory_space<vmem>>, vector<8x1xf32>,
      %cst_56 = arith.constant 0.000000e+00 : f32
      %72 = vector.broadcast %cst_56 : f32 to vector<8x1xf32>
      %c0_57 = arith.constant 0 : index
      %c0_58 = arith.constant 0 : index
      %73 = vector.load %arg11[%c0_57, %c0_58] : memref<8x1xf32, #tpu.memory_space<vmem>>, vector<8x1xf32>
      tpu.vector_store %arg11[%c0_57, %c0_58], %72 {strides = array<i32>} : memref<8x1xf32, #tpu.memory_space<vmem>>, vector<8x1xf32>,
      %cst_59 = arith.constant 0xFF800000 : f32
      %74 = vector.broadcast %cst_59 : f32 to vector<8x4x1xf32>
      %c0_60 = arith.constant 0 : index
      %c0_61 = arith.constant 0 : index
      %c0_62 = arith.constant 0 : index
      %75 = vector.load %arg12[%c0_60, %c0_61, %c0_62] : memref<8x4x1xf32, #tpu.memory_space<vmem>>, vector<8x4x1xf32>
      tpu.vector_store %arg12[%c0_60, %c0_61, %c0_62], %74 {strides = array<i32>} : memref<8x4x1xf32, #tpu.memory_space<vmem>>, vector<8x4x1xf32>,
      %cst_63 = arith.constant 0.000000e+00 : f32
      %76 = vector.broadcast %cst_63 : f32 to vector<8x4x1xf32>
      %c0_64 = arith.constant 0 : index
      %c0_65 = arith.constant 0 : index
      %c0_66 = arith.constant 0 : index
      %77 = vector.load %arg13[%c0_64, %c0_65, %c0_66] : memref<8x4x1xf32, #tpu.memory_space<vmem>>, vector<8x4x1xf32>
      tpu.vector_store %arg13[%c0_64, %c0_65, %c0_66], %76 {strides = array<i32>} : memref<8x4x1xf32, #tpu.memory_space<vmem>>, vector<8x4x1xf32>,
    } else {
    }
    %c0 = arith.constant 0 : index
    %c0_1 = arith.constant 0 : index
    %3 = vector.load %arg9[%c0, %c0_1] : memref<8x128xbf16, #tpu.memory_space<vmem>>, vector<8x128xbf16>
    %c0_2 = arith.constant 0 : index
    %c0_3 = arith.constant 0 : index
    %4 = vector.load %arg5[%c0_2, %c0_3] : memref<128x256xbf16, #tpu.memory_space<vmem>>, vector<128x256xbf16>
    %cst = arith.constant dense<0.000000e+00> : vector<8x256xf32>
    %5 = tpu.matmul %3, %4, %cst {dimension_numbers = #tpu.dot_dimension_numbers<[1], [0], [0], [1], [0, 0, 1, 1], [], []>} : vector<8x128xbf16>, vector<128x256xbf16>, vector<8x256xf32> -> vector<8x256xf32>
    %6 = tpu.iota {dimensions = array<i32: 1>} : vector<8x256xi32>
    %c256_i32 = arith.constant 256 : i32
    %7 = arith.muli %arg1, %c256_i32 : i32
    %8 = vector.broadcast %7 : i32 to vector<8x256xi32>
    %9 = arith.addi %6, %8 : vector<8x256xi32>
    %10 = arith.sitofp %9 : vector<8x256xi32> to vector<8x256xf32>
    %cst_4 = arith.constant dense<0xFF800000> : vector<8xf32>
    %11 = vector.multi_reduction <maximumf>, %5, %cst_4 [1] : vector<8x256xf32> to vector<8xf32>
    %12 = vector.shape_cast %11 : vector<8xf32> to vector<8x1xf32>
    %13 = vector.broadcast %12 : vector<8x1xf32> to vector<8x256xf32>
    %14 = arith.cmpf oeq, %5, %13 : vector<8x256xf32>
    %cst_5 = arith.constant 1.000000e+09 : f32
    %15 = vector.broadcast %cst_5 : f32 to vector<8x256xf32>
    %16 = arith.select %14, %10, %15 : vector<8x256xi1>, vector<8x256xf32>
    %cst_6 = arith.constant dense<0x7F800000> : vector<8xf32>
    %17 = vector.multi_reduction <minimumf>, %16, %cst_6 [1] : vector<8x256xf32> to vector<8xf32>
    %18 = vector.shape_cast %17 : vector<8xf32> to vector<8x1xf32>
    %c0_7 = arith.constant 0 : index
    %c0_8 = arith.constant 0 : index
    %19 = vector.load %arg10[%c0_7, %c0_8] : memref<8x1xf32, #tpu.memory_space<vmem>>, vector<8x1xf32>
    %20 = arith.cmpf ogt, %12, %19 : vector<8x1xf32>
    %c0_9 = arith.constant 0 : index
    %c0_10 = arith.constant 0 : index
    %21 = vector.load %arg11[%c0_9, %c0_10] : memref<8x1xf32, #tpu.memory_space<vmem>>, vector<8x1xf32>
    %22 = arith.select %20, %18, %21 : vector<8x1xi1>, vector<8x1xf32>
    %c0_11 = arith.constant 0 : index
    %c0_12 = arith.constant 0 : index
    %23 = vector.load %arg11[%c0_11, %c0_12] : memref<8x1xf32, #tpu.memory_space<vmem>>, vector<8x1xf32>
    tpu.vector_store %arg11[%c0_11, %c0_12], %22 {strides = array<i32>} : memref<8x1xf32, #tpu.memory_space<vmem>>, vector<8x1xf32>,
    %c0_13 = arith.constant 0 : index
    %c0_14 = arith.constant 0 : index
    %24 = vector.load %arg10[%c0_13, %c0_14] : memref<8x1xf32, #tpu.memory_space<vmem>>, vector<8x1xf32>
    %25 = arith.select %20, %12, %24 : vector<8x1xi1>, vector<8x1xf32>
    %c0_15 = arith.constant 0 : index
    %c0_16 = arith.constant 0 : index
    %26 = vector.load %arg10[%c0_15, %c0_16] : memref<8x1xf32, #tpu.memory_space<vmem>>, vector<8x1xf32>
    tpu.vector_store %arg10[%c0_15, %c0_16], %25 {strides = array<i32>} : memref<8x1xf32, #tpu.memory_space<vmem>>, vector<8x1xf32>,
    %c0_17 = arith.constant 0 : index
    %c0_18 = arith.constant 0 : index
    %27 = vector.load %arg6[%c0_17, %c0_18] : memref<8x1xf32, #tpu.memory_space<vmem>>, vector<8x1xf32>
    %cst_19 = arith.constant 0.000000e+00 : f32
    %28 = vector.broadcast %cst_19 : f32 to vector<8x1xf32>
    %29 = arith.cmpf one, %27, %28 : vector<8x1xf32>
    %cst_20 = arith.constant 1.000000e+00 : f32
    %30 = vector.broadcast %cst_20 : f32 to vector<8x1xf32>
    %31 = arith.select %29, %27, %30 : vector<8x1xi1>, vector<8x1xf32>
    %32 = vector.broadcast %31 : vector<8x1xf32> to vector<8x256xf32>
    %33 = arith.divf %5, %32 : vector<8x256xf32>
    %34 = vector.shape_cast %33 : vector<8x256xf32> to vector<8x1x256xf32>
    %c0_21 = arith.constant 0 : index
    %c0_22 = arith.constant 0 : index
    %c0_23 = arith.constant 0 : index
    %35 = vector.load %arg7[%c0_21, %c0_22, %c0_23] : memref<8x4x256xf32, #tpu.memory_space<vmem>>, vector<8x4x256xf32>
    %36 = vector.broadcast %34 : vector<8x1x256xf32> to vector<8x4x256xf32>
    %37 = arith.addf %36, %35 : vector<8x4x256xf32>
    %cst_24 = arith.constant dense<0xFF800000> : vector<8x4xf32>
    %38 = vector.multi_reduction <maximumf>, %37, %cst_24 [2] : vector<8x4x256xf32> to vector<8x4xf32>
    %39 = vector.shape_cast %38 : vector<8x4xf32> to vector<8x4x1xf32>
    %40 = vector.broadcast %39 : vector<8x4x1xf32> to vector<8x4x256xf32>
    %41 = arith.cmpf oeq, %37, %40 : vector<8x4x256xf32>
    %42 = vector.shape_cast %10 : vector<8x256xf32> to vector<8x1x256xf32>
    %cst_25 = arith.constant 1.000000e+09 : f32
    %43 = vector.shape_cast %42 : vector<8x1x256xf32> to vector<8x1x256xf32>
    %44 = vector.broadcast %43 : vector<8x1x256xf32> to vector<8x4x256xf32>
    %45 = vector.broadcast %cst_25 : f32 to vector<8x4x256xf32>
    %46 = arith.select %41, %44, %45 : vector<8x4x256xi1>, vector<8x4x256xf32>
    %cst_26 = arith.constant dense<0x7F800000> : vector<8x4xf32>
    %47 = vector.multi_reduction <minimumf>, %46, %cst_26 [2] : vector<8x4x256xf32> to vector<8x4xf32>
    %48 = vector.shape_cast %47 : vector<8x4xf32> to vector<8x4x1xf32>
    %c0_27 = arith.constant 0 : index
    %c0_28 = arith.constant 0 : index
    %c0_29 = arith.constant 0 : index
    %49 = vector.load %arg12[%c0_27, %c0_28, %c0_29] : memref<8x4x1xf32, #tpu.memory_space<vmem>>, vector<8x4x1xf32>
    %50 = arith.cmpf ogt, %39, %49 : vector<8x4x1xf32>
    %c0_30 = arith.constant 0 : index
    %c0_31 = arith.constant 0 : index
    %c0_32 = arith.constant 0 : index
    %51 = vector.load %arg13[%c0_30, %c0_31, %c0_32] : memref<8x4x1xf32, #tpu.memory_space<vmem>>, vector<8x4x1xf32>
    %52 = arith.select %50, %48, %51 : vector<8x4x1xi1>, vector<8x4x1xf32>
    %c0_33 = arith.constant 0 : index
    %c0_34 = arith.constant 0 : index
    %c0_35 = arith.constant 0 : index
    %53 = vector.load %arg13[%c0_33, %c0_34, %c0_35] : memref<8x4x1xf32, #tpu.memory_space<vmem>>, vector<8x4x1xf32>
    tpu.vector_store %arg13[%c0_33, %c0_34, %c0_35], %52 {strides = array<i32>} : memref<8x4x1xf32, #tpu.memory_space<vmem>>, vector<8x4x1xf32>,
    %c0_36 = arith.constant 0 : index
    %c0_37 = arith.constant 0 : index
    %c0_38 = arith.constant 0 : index
    %54 = vector.load %arg12[%c0_36, %c0_37, %c0_38] : memref<8x4x1xf32, #tpu.memory_space<vmem>>, vector<8x4x1xf32>
    %55 = arith.select %50, %39, %54 : vector<8x4x1xi1>, vector<8x4x1xf32>
    %c0_39 = arith.constant 0 : index
    %c0_40 = arith.constant 0 : index
    %c0_41 = arith.constant 0 : index
    %56 = vector.load %arg12[%c0_39, %c0_40, %c0_41] : memref<8x4x1xf32, #tpu.memory_space<vmem>>, vector<8x4x1xf32>
    tpu.vector_store %arg12[%c0_39, %c0_40, %c0_41], %55 {strides = array<i32>} : memref<8x4x1xf32, #tpu.memory_space<vmem>>, vector<8x4x1xf32>,
    %c1_i32 = arith.constant 1 : i32
    %57 = arith.cmpi eq, %arg1, %c1_i32 : i32
    %58 = arith.extui %57 : i1 to i32
    %c0_i32_42 = arith.constant 0 : i32
    %59 = arith.cmpi ne, %58, %c0_i32_42 : i32
    scf.if %59 {
      %c0_43 = arith.constant 0 : index
      %c0_44 = arith.constant 0 : index
      %60 = vector.load %arg11[%c0_43, %c0_44] : memref<8x1xf32, #tpu.memory_space<vmem>>, vector<8x1xf32>
      %61 = vector.shape_cast %60 : vector<8x1xf32> to vector<8x1x1xf32>
      %c0_45 = arith.constant 0 : index
      %c0_46 = arith.constant 0 : index
      %62 = vector.load %arg6[%c0_45, %c0_46] : memref<8x1xf32, #tpu.memory_space<vmem>>, vector<8x1xf32>
      %63 = vector.shape_cast %62 : vector<8x1xf32> to vector<8x1x1xf32>
      %cst_47 = arith.constant 0.000000e+00 : f32
      %64 = vector.broadcast %cst_47 : f32 to vector<8x1x1xf32>
      %65 = arith.cmpf one, %63, %64 : vector<8x1x1xf32>
      %c0_48 = arith.constant 0 : index
      %c0_49 = arith.constant 0 : index
      %c0_50 = arith.constant 0 : index
      %66 = vector.load %arg13[%c0_48, %c0_49, %c0_50] : memref<8x4x1xf32, #tpu.memory_space<vmem>>, vector<8x4x1xf32>
      %67 = vector.shape_cast %65 : vector<8x1x1xi1> to vector<8x1x1xi1>
      %68 = vector.broadcast %67 : vector<8x1x1xi1> to vector<8x4x1xi1>
      %69 = vector.shape_cast %61 : vector<8x1x1xf32> to vector<8x1x1xf32>
      %70 = vector.broadcast %69 : vector<8x1x1xf32> to vector<8x4x1xf32>
      %71 = arith.select %68, %66, %70 : vector<8x4x1xi1>, vector<8x4x1xf32>
      %72 = arith.fptosi %71 : vector<8x4x1xf32> to vector<8x4x1xi32>
      %c0_51 = arith.constant 0 : index
      %c0_52 = arith.constant 0 : index
      %c0_53 = arith.constant 0 : index
      %73 = vector.load %arg8[%c0_51, %c0_52, %c0_53] : memref<8x4x1xi32, #tpu.memory_space<vmem>>, vector<8x4x1xi32>
      tpu.vector_store %arg8[%c0_51, %c0_52, %c0_53], %72 {strides = array<i32>} : memref<8x4x1xi32, #tpu.memory_space<vmem>>, vector<8x4x1xi32>,
    } else {
    }
    return
  }
  func.func @transform_0(%arg0: i32, %arg1: i32) -> (i32, i32) {
    %c0_i32 = arith.constant 0 : i32
    %c0_i32_0 = arith.constant 0 : i32
    return %arg0, %c0_i32 : i32, i32
  }
  func.func @transform_1(%arg0: i32, %arg1: i32) -> (i32, i32) {
    %c0_i32 = arith.constant 0 : i32
    %c0_i32_0 = arith.constant 0 : i32
    %c0_i32_1 = arith.constant 0 : i32
    return %c0_i32, %c0_i32_0 : i32, i32
  }
  func.func @transform_2(%arg0: i32, %arg1: i32) -> (i32, i32) {
    %c0_i32 = arith.constant 0 : i32
    %c0_i32_0 = arith.constant 0 : i32
    %c0_i32_1 = arith.constant 0 : i32
    return %c0_i32, %c0_i32_0 : i32, i32
  }
  func.func @transform_3(%arg0: i32, %arg1: i32) -> (i32, i32) {
    %c0_i32 = arith.constant 0 : i32
    %c0_i32_0 = arith.constant 0 : i32
    return %c0_i32, %arg1 : i32, i32
  }
  func.func @transform_4(%arg0: i32, %arg1: i32) -> (i32, i32) {
    %c0_i32 = arith.constant 0 : i32
    %c0_i32_0 = arith.constant 0 : i32
    return %arg0, %c0_i32 : i32, i32
  }
  func.func @transform_5(%arg0: i32, %arg1: i32) -> (i32, i32, i32) {
    %c0_i32 = arith.constant 0 : i32
    %c0_i32_0 = arith.constant 0 : i32
    return %arg0, %c0_i32, %arg1 : i32, i32, i32
  }
  func.func @transform_6(%arg0: i32, %arg1: i32) -> (i32, i32, i32) {
    %c0_i32 = arith.constant 0 : i32
    %c0_i32_0 = arith.constant 0 : i32
    %c0_i32_1 = arith.constant 0 : i32
    return %arg0, %c0_i32, %c0_i32_0 : i32, i32, i32
  }
}

</mosaic_0001>

<llo_original>
// kernel: tpu_custom_call.1
$region0: #{tpu_custom_call.1}
  #allocation0 [shape = 'u32[]', space=smem, size = 0x4, offset = 0x4, fixed_abs, tag = 'smem constant byte address 0x4 - core index']
  #allocation1 [shape = 'u32[72,128]{1,0:T(1,128)}', space=vmem, size = 0x9000, scoped, tag = 'internal scratch']
  #allocation2 [shape = 'bf16[8,128]{1,0:T(8,128)(2,1)}', space=vmem, size = 0x800, scoped, tag = 'scratch operand']
  #allocation3 [shape = 'f32[8,1]{1,0:T(8,128)}', space=vmem, size = 0x1000, scoped, tag = 'scratch operand']
  #allocation4 [shape = 'f32[8,1]{1,0:T(8,128)}', space=vmem, size = 0x1000, scoped, tag = 'scratch operand']
  #allocation5 [shape = 'f32[8,4,1]{2,1,0:T(4,128)}', space=vmem, size = 0x4000, scoped, tag = 'scratch operand']
  #allocation6 [shape = 'f32[8,4,1]{2,1,0:T(4,128)}', space=vmem, size = 0x4000, scoped, tag = 'scratch operand']
  %s0 = inlined_call_operand.vmem [shape: bf16[8,128], index: 0, kind: input, shape index: {}]
  %s1 = inlined_call_operand.hbm [shape: bf16[128,128], index: 1, kind: input, shape index: {}]
  %s2 = inlined_call_operand.vmem [shape: f32[1,128], index: 2, kind: input, shape index: {}]
  %s3 = inlined_call_operand.hbm [shape: bf16[128,512], index: 3, kind: input, shape index: {}]
  %s4 = inlined_call_operand.vmem [shape: f32[8,1], index: 4, kind: input, shape index: {}]
  %s5 = inlined_call_operand.hbm [shape: f32[8,4,512], index: 5, kind: input, shape index: {}]
  %s6 = inlined_call_operand.vmem [shape: s32[8,4,1], index: 6, kind: output, shape index: {}]
  %s7 = sld [smem:[#allocation0]]
  $region77: #{tpu_custom_call.1} parent=0
    _
  %s9 = ssub.s32 1, %s7
  %s10 = scalar_select 0, %s9, %s7
  $region1: #{tpu_custom_call.1} parent=0
    #allocation7 [shape = 'u8[32768]{0}', space=vmem, size = 0x8000, scoped, tag = 'input window, operand 1, single buffered']
    #allocation8 [shape = 's32[2]{0}', space=sflag, size = 0x8, scoped, tag = 'scoped memory for tpu_custom_call.1']
    #allocation9 [shape = 'u8[131072]{0}', space=vmem, size = 0x20000, scoped, tag = 'input window, operand 3']
    #allocation10 [shape = 's32[2]{0}', space=sflag, size = 0x8, scoped, tag = 'scoped memory for tpu_custom_call.1']
    #allocation11 [shape = 'u8[65536]{0}', space=vmem, size = 0x10000, scoped, tag = 'input window, operand 5']
    %11 = vsyncpa [#allocation8], 0
    %12 = vsyncpa [#allocation10], 0
    %s13 = scalar_lea.sflag [#allocation10], 1
    %14 = vsyncpa %s13, 0
    loop: start=0, step=1, limit=4
    $region2: #{tpu_custom_call.1} parent=1 // loop_pre_header
      _
    $region3: #{tpu_custom_call.1} parent=1 // loop_header
      %s16 = sphi 0, %s20
      %p17 = scmp.ge.s32.totalorder %s16, 4
      %s23 = sphi 0, %s35
      %s24 = sphi 0, %s31
      %s25 = sphi 0, %s23
      %s26 = sphi 0, %s24
      %s27 = sphi 0, %s25
      %s28 = sphi 0, %s26
      %s38 = sphi 0, %s40
      %s41 = sphi 0, %s38
      %s42 = sphi 0, %s41
      %s58 = sphi 0, %s42
      %s62 = sphi 0, %s62
      %s64 = sphi 0, %s62
      %s65 = sphi 0, %s64
      %s79 = sphi 0, %s65
      %s83 = sphi 0, %s83
      %s85 = sphi 0, %s83
      %s86 = sphi 0, %s85
      %s100 = sphi 0, %s86
      %s106 = sphi 0, %s108
      %s109 = sphi 0, %s106
      %s110 = sphi 0, %s109
      %s126 = sphi 0, %s110
      %s132 = sphi 0, %s134
      %s135 = sphi 0, %s132
      %s136 = sphi 0, %s135
      %s152 = sphi 0, %s136
      %s160 = sphi 0, %s162
      %s163 = sphi 0, %s160
      %s164 = sphi 0, %s163
      %s180 = sphi 0, %s164
      %s186 = sphi 0, %s188
      %s189 = sphi 0, %s186
      %s190 = sphi 0, %s189
      %s206 = sphi 0, %s190
    $region4: #{tpu_custom_call.1} parent=1 // loop_header_branch
      %19 = sbr.rel (%p17) target = $region8
    $region5: #{tpu_custom_call.1} parent=1 // loop_body
      %s21 = ssub.s32 %s16, 1
      %s22 = ssub.s32 %s16, 2
      %s29 = sadd.s32 1, %s24
      %p30 = scmp.ge.s32.totalorder %s29, 2
      %s31 = scalar_select %p30, 0, %s29
      %s32 = sadd.s32 1, %s23
      %s33 = scalar_select %p30, %s32, %s23
      %p34 = scmp.ge.s32.totalorder %s33, 1
      %s35 = scalar_select %p34, 0, %s33
      %s36 = ssub.s32 %s23, %s35
      %p37 = scmp.eq.s32.totalorder %s36, 0
      %s39 = sadd.s32 %s38, 1
      %s40 = scalar_select %p37, %s38, %s39
      %p43 = pneg %p37
      %p44 = scmp.eq.s32.totalorder %s16, 1
      %p45 = por %p43, %p44
      %p46 = scmp.ne.s32.totalorder %s38, %s41
      %p47 = scmp.eq.s32.totalorder %s16, 0
      %p48 = por %p46, %p47
      %p49 = scmp.ne.s32.totalorder %s38, %s41
      %p50 = scmp.eq.s32.totalorder %s21, 1
      %p51 = por %p49, %p50
      %p52 = scmp.ne.s32.totalorder %s41, %s42
      %p53 = scmp.eq.s32.totalorder %s21, 0
      %p54 = por %p52, %p53
      %p55 = scmp.ne.s32.totalorder %s41, %s42
      %p56 = scmp.eq.s32.totalorder %s22, 1
      %p57 = por %p55, %p56
      %p59 = scmp.ne.s32.totalorder %s42, %s58
      %p60 = scmp.eq.s32.totalorder %s22, 0
      %p61 = por %p59, %p60
      %s63 = sadd.s32 %s62, 1
      %p66 = scmp.eq.s32.totalorder %s16, 1
      %p67 = scmp.ne.s32.totalorder %s62, %s64
      %p68 = scmp.eq.s32.totalorder %s16, 0
      %p69 = por %p67, %p68
      %p70 = scmp.ne.s32.totalorder %s62, %s64
      %p71 = scmp.eq.s32.totalorder %s21, 1
      %p72 = por %p70, %p71
      %p73 = scmp.ne.s32.totalorder %s64, %s65
      %p74 = scmp.eq.s32.totalorder %s21, 0
      %p75 = por %p73, %p74
      %p76 = scmp.ne.s32.totalorder %s64, %s65
      %p77 = scmp.eq.s32.totalorder %s22, 1
      %p78 = por %p76, %p77
      %p80 = scmp.ne.s32.totalorder %s65, %s79
      %p81 = scmp.eq.s32.totalorder %s22, 0
      %p82 = por %p80, %p81
      %s84 = sadd.s32 %s83, 1
      %p87 = scmp.eq.s32.totalorder %s16, 1
      %p88 = scmp.ne.s32.totalorder %s83, %s85
      %p89 = scmp.eq.s32.totalorder %s16, 0
      %p90 = por %p88, %p89
      %p91 = scmp.ne.s32.totalorder %s83, %s85
      %p92 = scmp.eq.s32.totalorder %s21, 1
      %p93 = por %p91, %p92
      %p94 = scmp.ne.s32.totalorder %s85, %s86
      %p95 = scmp.eq.s32.totalorder %s21, 0
      %p96 = por %p94, %p95
      %p97 = scmp.ne.s32.totalorder %s85, %s86
      %p98 = scmp.eq.s32.totalorder %s22, 1
      %p99 = por %p97, %p98
      %p101 = scmp.ne.s32.totalorder %s86, %s100
      %p102 = scmp.eq.s32.totalorder %s22, 0
      %p103 = por %p101, %p102
      %s104 = ssub.s32 %s24, %s31
      %p105 = scmp.eq.s32.totalorder %s104, 0
      %s107 = sadd.s32 %s106, 1
      %s108 = scalar_select %p105, %s106, %s107
      %p111 = pneg %p105
      %p112 = scmp.eq.s32.totalorder %s16, 1
      %p113 = por %p111, %p112
      %p114 = scmp.ne.s32.totalorder %s106, %s109
      %p115 = scmp.eq.s32.totalorder %s16, 0
      %p116 = por %p114, %p115
      %p117 = scmp.ne.s32.totalorder %s106, %s109
      %p118 = scmp.eq.s32.totalorder %s21, 1
      %p119 = por %p117, %p118
      %p120 = scmp.ne.s32.totalorder %s109, %s110
      %p121 = scmp.eq.s32.totalorder %s21, 0
      %p122 = por %p120, %p121
      %p123 = scmp.ne.s32.totalorder %s109, %s110
      %p124 = scmp.eq.s32.totalorder %s22, 1
      %p125 = por %p123, %p124
      %p127 = scmp.ne.s32.totalorder %s110, %s126
      %p128 = scmp.eq.s32.totalorder %s22, 0
      %p129 = por %p127, %p128
      %s130 = ssub.s32 %s23, %s35
      %p131 = scmp.eq.s32.totalorder %s130, 0
      %s133 = sadd.s32 %s132, 1
      %s134 = scalar_select %p131, %s132, %s133
      %p137 = pneg %p131
      %p138 = scmp.eq.s32.totalorder %s16, 1
      %p139 = por %p137, %p138
      %p140 = scmp.ne.s32.totalorder %s132, %s135
      %p141 = scmp.eq.s32.totalorder %s16, 0
      %p142 = por %p140, %p141
      %p143 = scmp.ne.s32.totalorder %s132, %s135
      %p144 = scmp.eq.s32.totalorder %s21, 1
      %p145 = por %p143, %p144
      %p146 = scmp.ne.s32.totalorder %s135, %s136
      %p147 = scmp.eq.s32.totalorder %s21, 0
      %p148 = por %p146, %p147
      %p149 = scmp.ne.s32.totalorder %s135, %s136
      %p150 = scmp.eq.s32.totalorder %s22, 1
      %p151 = por %p149, %p150
      %p153 = scmp.ne.s32.totalorder %s136, %s152
      %p154 = scmp.eq.s32.totalorder %s22, 0
      %p155 = por %p153, %p154
      %s156 = ssub.s32 %s23, %s35
      %s157 = ssub.s32 %s24, %s31
      %s158 = sor.u32 %s156, %s157
      %p159 = scmp.eq.s32.totalorder %s158, 0
      %s161 = sadd.s32 %s160, 1
      %s162 = scalar_select %p159, %s160, %s161
      %p165 = pneg %p159
      %p166 = scmp.eq.s32.totalorder %s16, 1
      %p167 = por %p165, %p166
      %p168 = scmp.ne.s32.totalorder %s160, %s163
      %p169 = scmp.eq.s32.totalorder %s16, 0
      %p170 = por %p168, %p169
      %p171 = scmp.ne.s32.totalorder %s160, %s163
      %p172 = scmp.eq.s32.totalorder %s21, 1
      %p173 = por %p171, %p172
      %p174 = scmp.ne.s32.totalorder %s163, %s164
      %p175 = scmp.eq.s32.totalorder %s21, 0
      %p176 = por %p174, %p175
      %p177 = scmp.ne.s32.totalorder %s163, %s164
      %p178 = scmp.eq.s32.totalorder %s22, 1
      %p179 = por %p177, %p178
      %p181 = scmp.ne.s32.totalorder %s164, %s180
      %p182 = scmp.eq.s32.totalorder %s22, 0
      %p183 = por %p181, %p182
      %s184 = ssub.s32 %s23, %s35
      %p185 = scmp.eq.s32.totalorder %s184, 0
      %s187 = sadd.s32 %s186, 1
      %s188 = scalar_select %p185, %s186, %s187
      %p191 = pneg %p185
      %p192 = scmp.eq.s32.totalorder %s16, 1
      %p193 = por %p191, %p192
      %p194 = scmp.ne.s32.totalorder %s186, %s189
      %p195 = scmp.eq.s32.totalorder %s16, 0
      %p196 = por %p194, %p195
      %p197 = scmp.ne.s32.totalorder %s186, %s189
      %p198 = scmp.eq.s32.totalorder %s21, 1
      %p199 = por %p197, %p198
      %p200 = scmp.ne.s32.totalorder %s189, %s190
      %p201 = scmp.eq.s32.totalorder %s21, 0
      %p202 = por %p200, %p201
      %p203 = scmp.ne.s32.totalorder %s189, %s190
      %p204 = scmp.eq.s32.totalorder %s22, 1
      %p205 = por %p203, %p204
      %p207 = scmp.ne.s32.totalorder %s190, %s206
      %p208 = scmp.eq.s32.totalorder %s22, 0
      %p209 = por %p207, %p208
      %p210 = scmp.le.s32.totalorder 1, %s16
      %p211 = scmp.lt.s32.totalorder %s16, 3
      %p212 = pnand %p210, %p211
      %p213 = pneg %p212
      // Predicated region
      $region9: #{tpu_custom_call.1} parent=5 // pred_check
        _
      $region10: #{tpu_custom_call.1} parent=5 // pred_check_branch
        %215 = sbr.rel (%p212) target = $region12
      $region11: #{tpu_custom_call.1} parent=5 // pred_region
        %s216 = ssub.s32 %s16, 1
        // Predicated region
        $region13: #{tpu_custom_call.1} parent=11 // pred_check
          %p217 = pneg %p54
        $region14: #{tpu_custom_call.1} parent=11 // pred_check_branch
          %219 = sbr.rel (%p217) target = $region16
        $region15: #{tpu_custom_call.1} parent=11 // pred_region
          %p220 = scmp.lt.s32.totalorder %s25, 0
          %s221 = scalar_select %p220, %s25, 0
          %s222 = smul.addr %s221, 4
          %s223 = scalar_lea.vmem %s0, %s222
        $region16: #{tpu_custom_call.1} parent=11 // pred_fallthru
          _
        // Predicated region
        $region17: #{tpu_custom_call.1} parent=11 // pred_check
          %p224 = pneg %p75
        $region18: #{tpu_custom_call.1} parent=11 // pred_check_branch
          %226 = sbr.rel (%p224) target = $region20
        $region19: #{tpu_custom_call.1} parent=11 // pred_region
          %228 = vsyncadd [#allocation8], 0
          %s229 = sshll.u32 %s1, 4
          %s230 = int_to_ptr.hbm [resolvable:$true] %s229
          %s231 = sshll.u32 [#allocation7], 4
          %s232 = int_to_ptr.vmem [resolvable:$true] %s231
          %237 = dma.hbm_to_vmem [thread:$0]  %s230, 1024, %s232, [#allocation8], 64, 64, 4
        $region20: #{tpu_custom_call.1} parent=11 // pred_fallthru
          _
        // Predicated region
        $region21: #{tpu_custom_call.1} parent=11 // pred_check
          %p238 = pneg %p96
        $region22: #{tpu_custom_call.1} parent=11 // pred_check_branch
          %240 = sbr.rel (%p238) target = $region24
        $region23: #{tpu_custom_call.1} parent=11 // pred_region
          _
        $region24: #{tpu_custom_call.1} parent=11 // pred_fallthru
          _
        // Predicated region
        $region25: #{tpu_custom_call.1} parent=11 // pred_check
          %p241 = pneg %p148
        $region26: #{tpu_custom_call.1} parent=11 // pred_check_branch
          %243 = sbr.rel (%p241) target = $region28
        $region27: #{tpu_custom_call.1} parent=11 // pred_region
          %p244 = scmp.lt.s32.totalorder %s25, 0
          %s245 = scalar_select %p244, %s25, 0
          %s246 = smul.addr %s245, 8
          %s247 = scalar_lea.vmem %s4, %s246
        $region28: #{tpu_custom_call.1} parent=11 // pred_fallthru
          _
      $region12: #{tpu_custom_call.1} parent=5 // pred_fallthru
        _
      %p248 = scmp.lt.s32.totalorder %s16, 2
      // Predicated region
      $region29: #{tpu_custom_call.1} parent=5 // pred_check
        %p249 = pneg %p248
      $region30: #{tpu_custom_call.1} parent=5 // pred_check_branch
        %251 = sbr.rel (%p249) target = $region32
      $region31: #{tpu_custom_call.1} parent=5 // pred_region
        // Predicated region
        $region33: #{tpu_custom_call.1} parent=31 // pred_check
          %p252 = pneg %p116
        $region34: #{tpu_custom_call.1} parent=31 // pred_check_branch
          %254 = sbr.rel (%p252) target = $region36
        $region35: #{tpu_custom_call.1} parent=31 // pred_region
          %s255 = sand.u32 %s16, 1
          %s256 = scalar_lea.sflag [#allocation10], %s255
          %s257 = sand.u32 %s106, 1
          %s258 = smul.addr %s257, 128
          %s259 = scalar_lea.vmem [#allocation9], %s258
          %s260 = smul.u32 2, %s24
          %262 = vsyncadd %s256, 0
          %s263 = smul.addr %s260, 4
          %s264 = scalar_lea.hbm %s3, %s263
          %s265 = sshll.u32 %s264, 4
          %s266 = int_to_ptr.hbm [resolvable:$true] %s265
          %s267 = sshll.u32 %s259, 4
          %s268 = int_to_ptr.vmem [resolvable:$true] %s267
          %273 = dma.hbm_to_vmem [thread:$0]  %s266, 2048, %s268, %s256, 256, 128, 8
        $region36: #{tpu_custom_call.1} parent=31 // pred_fallthru
          _
        // Predicated region
        $region37: #{tpu_custom_call.1} parent=31 // pred_check
          %p274 = pneg %p170
        $region38: #{tpu_custom_call.1} parent=31 // pred_check_branch
          %276 = sbr.rel (%p274) target = $region40
        $region39: #{tpu_custom_call.1} parent=31 // pred_region
          %s277 = sand.u32 %s16, 1
          %s278 = scalar_lea.sflag [#allocation10], %s277
          %s279 = sand.u32 %s160, 1
          %s280 = smul.addr %s279, 64
          %s281 = scalar_lea.vmem [#allocation11], %s280
          %s282 = smul.u32 8, %s23
          %s283 = smul.u32 2, %s24
          %285 = vsyncadd %s278, 0
          %s286 = smul.addr %s282, 4
          %s287 = sadd.s32 %s283, %s286
          %s288 = smul.addr %s287, 4
          %s289 = scalar_lea.hbm %s5, %s288
          %s290 = sshll.u32 %s289, 4
          %s291 = int_to_ptr.hbm [resolvable:$true] %s290
          %s292 = sshll.u32 %s281, 4
          %s293 = int_to_ptr.vmem [resolvable:$true] %s292
          %298 = dma.hbm_to_vmem [thread:$0]  %s291, 1024, %s293, %s278, 256, 128, 8
        $region40: #{tpu_custom_call.1} parent=31 // pred_fallthru
          _
      $region32: #{tpu_custom_call.1} parent=5 // pred_fallthru
        _
      %p299 = scmp.le.s32.totalorder 1, %s16
      %p300 = scmp.lt.s32.totalorder %s16, 3
      %p301 = pnand %p299, %p300
      %p302 = pneg %p301
      // Predicated region
      $region41: #{tpu_custom_call.1} parent=5 // pred_check
        _
      $region42: #{tpu_custom_call.1} parent=5 // pred_check_branch
        %304 = sbr.rel (%p301) target = $region44
      $region43: #{tpu_custom_call.1} parent=5 // pred_region
        %s305 = ssub.s32 %s16, 1
        // Predicated region
        $region45: #{tpu_custom_call.1} parent=43 // pred_check
          %p306 = pneg %p75
        $region46: #{tpu_custom_call.1} parent=43 // pred_check_branch
          %308 = sbr.rel (%p306) target = $region48
        $region47: #{tpu_custom_call.1} parent=43 // pred_region
          %310 = dma.done [#allocation8], 1024
        $region48: #{tpu_custom_call.1} parent=43 // pred_fallthru
          _
        %s311 = sand.u32 %s21, 1
        %s312 = scalar_lea.sflag [#allocation10], %s311
        %s313 = sand.u32 %s109, 1
        %s314 = smul.addr %s313, 128
        %s315 = scalar_lea.vmem [#allocation9], %s314
        // Predicated region
        $region49: #{tpu_custom_call.1} parent=43 // pred_check
          %p316 = pneg %p122
        $region50: #{tpu_custom_call.1} parent=43 // pred_check_branch
          %318 = sbr.rel (%p316) target = $region52
        $region51: #{tpu_custom_call.1} parent=43 // pred_region
          %320 = dma.done %s312, 2048
        $region52: #{tpu_custom_call.1} parent=43 // pred_fallthru
          _
        %s321 = sand.u32 %s21, 1
        %s322 = scalar_lea.sflag [#allocation10], %s321
        %s323 = sand.u32 %s163, 1
        %s324 = smul.addr %s323, 64
        %s325 = scalar_lea.vmem [#allocation11], %s324
        // Predicated region
        $region53: #{tpu_custom_call.1} parent=43 // pred_check
          %p326 = pneg %p176
        $region54: #{tpu_custom_call.1} parent=43 // pred_check_branch
          %328 = sbr.rel (%p326) target = $region56
        $region55: #{tpu_custom_call.1} parent=43 // pred_region
          %330 = dma.done %s322, 1024
        $region56: #{tpu_custom_call.1} parent=43 // pred_fallthru
          _
        %p331 = scmp.lt.s32.totalorder %s25, 0
        %s332 = scalar_select %p331, %s25, 0
        %s333 = smul.addr %s332, 4
        %s334 = scalar_lea.vmem %s0, %s333
        %p335 = pneg %p54
        %p336 = pneg %p51
        %p337 = pneg %p75
        %p338 = pneg %p72
        %p339 = pneg %p96
        %p340 = pneg %p93
        %s341 = sand.u32 %s21, 1
        %s342 = scalar_lea.sflag [#allocation10], %s341
        %s343 = sand.u32 %s109, 1
        %s344 = smul.addr %s343, 128
        %s345 = scalar_lea.vmem [#allocation9], %s344
        %p346 = pneg %p122
        %p347 = pneg %p119
        %p348 = scmp.lt.s32.totalorder %s25, 0
        %s349 = scalar_select %p348, %s25, 0
        %s350 = smul.addr %s349, 8
        %s351 = scalar_lea.vmem %s4, %s350
        %p352 = pneg %p148
        %p353 = pneg %p145
        %s354 = sand.u32 %s21, 1
        %s355 = scalar_lea.sflag [#allocation10], %s354
        %s356 = sand.u32 %s163, 1
        %s357 = smul.addr %s356, 64
        %s358 = scalar_lea.vmem [#allocation11], %s357
        %p359 = pneg %p176
        %p360 = pneg %p173
        %p361 = pneg %p202
        %p362 = pneg %p199
        %s363 = smul.u32 8, %s25
        %p364 = scmp.lt.s32.totalorder %s363, 7
        %s365 = scalar_select %p364, %s363, 7
        %s366 = smul.addr %s365, 4
        %s367 = scalar_lea.vmem %s6, %s366
        %p368 = scmp.lt.s32.totalorder %s25, 0
        %s369 = scalar_select %p368, %s25, 0
        %s370 = smul.addr %s369, 4
        %s371 = scalar_lea.vmem %s0, %s370
        %s372 = smul.u32 2, %s26
        %p373 = scmp.lt.s32.totalorder %s25, 0
        %s374 = scalar_select %p373, %s25, 0
        %s375 = smul.addr %s374, 8
        %s376 = scalar_lea.vmem %s4, %s375
        %s377 = smul.u32 8, %s25
        %s378 = smul.u32 2, %s26
        %s379 = smul.u32 8, %s25
        %p380 = scmp.lt.s32.totalorder %s379, 7
        %s381 = scalar_select %p380, %s379, 7
        %s382 = smul.addr %s381, 4
        %s383 = scalar_lea.vmem %s6, %s382
        %s384 = smul.u32 8, %s25
        %p385 = scmp.eq.s32.totalorder %s26, 0
        // Predicated region
        $region57: #{tpu_custom_call.1} parent=43 // pred_check
          %p386 = pneg %p385
        $region58: #{tpu_custom_call.1} parent=43 // pred_check_branch
          %388 = sbr.rel (%p386) target = $region60
        $region59: #{tpu_custom_call.1} parent=43 // pred_region
          %v389 = vld [vmem:[%s371] sm:$0xf]
          %v390 = vld [vmem:[#allocation7] sm:$0xf]
          %v391 = vld [vmem:[#allocation7 + $0x4] sm:$0xf]
          %v392 = vld [vmem:[#allocation7 + $0x8] sm:$0xf]
          %v393 = vld [vmem:[#allocation7 + $0xc] sm:$0xf]
          %v394 = vld [vmem:[#allocation7 + $0x10] sm:$0xf]
          %v395 = vld [vmem:[#allocation7 + $0x14] sm:$0xf]
          %v396 = vld [vmem:[#allocation7 + $0x18] sm:$0xf]
          %v397 = vld [vmem:[#allocation7 + $0x1c] sm:$0xf]
          %v398 = vld [vmem:[#allocation7 + $0x20] sm:$0xf]
          %v399 = vld [vmem:[#allocation7 + $0x24] sm:$0xf]
          %v400 = vld [vmem:[#allocation7 + $0x28] sm:$0xf]
          %v401 = vld [vmem:[#allocation7 + $0x2c] sm:$0xf]
          %v402 = vld [vmem:[#allocation7 + $0x30] sm:$0xf]
          %v403 = vld [vmem:[#allocation7 + $0x34] sm:$0xf]
          %v404 = vld [vmem:[#allocation7 + $0x38] sm:$0xf]
          %v405 = vld [vmem:[#allocation7 + $0x3c] sm:$0xf]
          %v406 = vld [vmem:[%s2] sm:$0x1]
          %v408 = vperm.slane %v406, 0
          %v426 = vunpack.c.l.b16 %v390
          %v427 = vunpack.c.l.b16 %v391
          %v428 = vunpack.c.l.b16 %v392
          %v429 = vunpack.c.l.b16 %v393
          %v430 = vunpack.c.l.b16 %v394
          %v431 = vunpack.c.l.b16 %v395
          %v432 = vunpack.c.l.b16 %v396
          %v433 = vunpack.c.l.b16 %v397
          %v434 = vunpack.c.l.b16 %v398
          %v435 = vunpack.c.l.b16 %v399
          %v436 = vunpack.c.l.b16 %v400
          %v437 = vunpack.c.l.b16 %v401
          %v438 = vunpack.c.l.b16 %v402
          %v439 = vunpack.c.l.b16 %v403
          %v440 = vunpack.c.l.b16 %v404
          %v441 = vunpack.c.l.b16 %v405
          %v442 = vpack.c.b16 %v427, %v426
          %v443 = vpack.c.b16 %v429, %v428
          %v444 = vpack.c.b16 %v431, %v430
          %v445 = vpack.c.b16 %v433, %v432
          %v446 = vpack.c.b16 %v435, %v434
          %v447 = vpack.c.b16 %v437, %v436
          %v448 = vpack.c.b16 %v439, %v438
          %v449 = vpack.c.b16 %v441, %v440
          %458 = vmatpush.bf16.msra.mxu0 %v449
          %459 = vmatpush.bf16.msra.mxu0 %v448
          %460 = vmatpush.bf16.msra.mxu0 %v447
          %461 = vmatpush.bf16.msra.mxu0 %v446
          %462 = vmatpush.bf16.msra.mxu0 %v445
          %463 = vmatpush.bf16.msra.mxu0 %v444
          %464 = vmatpush.bf16.msra.mxu0 %v443
          %465 = vmatpush.bf16.msra.mxu0 %v442
          %466 = vmatmul.bf16.gmra.mxu0 %v389
          %v467 = vpop.f32.mrf.mxu0
          %v468 = vadd.f32 %v408, %v467
          %v469 = vpop.f32.mrf.mxu0
          %470 = vdwg.mxu0
          %v471 = vmax.f32 %v468, 0.0
          %v472 = vpack.c.bf16 %v471, %v471
          %473 = vst [vmem:[#allocation2] sm:$0xf] %v472
          %vm474 = vcmask 7168
          %475 = vst.msk [vmem:[#allocation3] sm:$0xff] %vm474, -inf
          %476 = vst.msk [vmem:[#allocation4] sm:$0xff] %vm474, 0.0
          %vm477 = vcmask 3072
          %478 = vst.msk [vmem:[#allocation5] sm:$0xf] %vm477, -inf
          %479 = vst.msk [vmem:[#allocation5 + $0x4] sm:$0xf] %vm477, -inf
          %480 = vst.msk [vmem:[#allocation5 + $0x8] sm:$0xf] %vm477, -inf
          %481 = vst.msk [vmem:[#allocation5 + $0xc] sm:$0xf] %vm477, -inf
          %482 = vst.msk [vmem:[#allocation5 + $0x10] sm:$0xf] %vm477, -inf
          %483 = vst.msk [vmem:[#allocation5 + $0x14] sm:$0xf] %vm477, -inf
          %484 = vst.msk [vmem:[#allocation5 + $0x18] sm:$0xf] %vm477, -inf
          %485 = vst.msk [vmem:[#allocation5 + $0x1c] sm:$0xf] %vm477, -inf
          %486 = vst.msk [vmem:[#allocation6] sm:$0xf] %vm477, 0.0
          %487 = vst.msk [vmem:[#allocation6 + $0x4] sm:$0xf] %vm477, 0.0
          %488 = vst.msk [vmem:[#allocation6 + $0x8] sm:$0xf] %vm477, 0.0
          %489 = vst.msk [vmem:[#allocation6 + $0xc] sm:$0xf] %vm477, 0.0
          %490 = vst.msk [vmem:[#allocation6 + $0x10] sm:$0xf] %vm477, 0.0
          %491 = vst.msk [vmem:[#allocation6 + $0x14] sm:$0xf] %vm477, 0.0
          %492 = vst.msk [vmem:[#allocation6 + $0x18] sm:$0xf] %vm477, 0.0
          %493 = vst.msk [vmem:[#allocation6 + $0x1c] sm:$0xf] %vm477, 0.0
        $region60: #{tpu_custom_call.1} parent=43 // pred_fallthru
          _
        %v494 = vld [vmem:[#allocation2] sm:$0xf]
        %v495 = vld [vmem:[%s315] sm:$0xff]
        %v496 = vld [vmem:[%s315 + $0x8] sm:$0xff]
        %v497 = vld [vmem:[%s315 + $0x10] sm:$0xff]
        %v498 = vld [vmem:[%s315 + $0x18] sm:$0xff]
        %v499 = vld [vmem:[%s315 + $0x20] sm:$0xff]
        %v500 = vld [vmem:[%s315 + $0x28] sm:$0xff]
        %v501 = vld [vmem:[%s315 + $0x30] sm:$0xff]
        %v502 = vld [vmem:[%s315 + $0x38] sm:$0xff]
        %v503 = vld [vmem:[%s315 + $0x40] sm:$0xff]
        %v504 = vld [vmem:[%s315 + $0x48] sm:$0xff]
        %v505 = vld [vmem:[%s315 + $0x50] sm:$0xff]
        %v506 = vld [vmem:[%s315 + $0x58] sm:$0xff]
        %v507 = vld [vmem:[%s315 + $0x60] sm:$0xff]
        %v508 = vld [vmem:[%s315 + $0x68] sm:$0xff]
        %v509 = vld [vmem:[%s315 + $0x70] sm:$0xff]
        %v510 = vld [vmem:[%s315 + $0x78] sm:$0xff]
        %v527 = vunpack.c.l.b16 %v495
        %v528 = vunpack.c.h.b16 %v495
        %v529 = vunpack.c.l.b16 %v496
        %v530 = vunpack.c.h.b16 %v496
        %v531 = vunpack.c.l.b16 %v497
        %v532 = vunpack.c.h.b16 %v497
        %v533 = vunpack.c.l.b16 %v498
        %v534 = vunpack.c.h.b16 %v498
        %v535 = vunpack.c.l.b16 %v499
        %v536 = vunpack.c.h.b16 %v499
        %v537 = vunpack.c.l.b16 %v500
        %v538 = vunpack.c.h.b16 %v500
        %v539 = vunpack.c.l.b16 %v501
        %v540 = vunpack.c.h.b16 %v501
        %v541 = vunpack.c.l.b16 %v502
        %v542 = vunpack.c.h.b16 %v502
        %v543 = vunpack.c.l.b16 %v503
        %v544 = vunpack.c.h.b16 %v503
        %v545 = vunpack.c.l.b16 %v504
        %v546 = vunpack.c.h.b16 %v504
        %v547 = vunpack.c.l.b16 %v505
        %v548 = vunpack.c.h.b16 %v505
        %v549 = vunpack.c.l.b16 %v506
        %v550 = vunpack.c.h.b16 %v506
        %v551 = vunpack.c.l.b16 %v507
        %v552 = vunpack.c.h.b16 %v507
        %v553 = vunpack.c.l.b16 %v508
        %v554 = vunpack.c.h.b16 %v508
        %v555 = vunpack.c.l.b16 %v509
        %v556 = vunpack.c.h.b16 %v509
        %v557 = vunpack.c.l.b16 %v510
        %v558 = vunpack.c.h.b16 %v510
        %v559 = vpack.c.b16 %v529, %v527
        %v560 = vpack.c.b16 %v530, %v528
        %v561 = vpack.c.b16 %v533, %v531
        %v562 = vpack.c.b16 %v534, %v532
        %v563 = vpack.c.b16 %v537, %v535
        %v564 = vpack.c.b16 %v538, %v536
        %v565 = vpack.c.b16 %v541, %v539
        %v566 = vpack.c.b16 %v542, %v540
        %v567 = vpack.c.b16 %v545, %v543
        %v568 = vpack.c.b16 %v546, %v544
        %v569 = vpack.c.b16 %v549, %v547
        %v570 = vpack.c.b16 %v550, %v548
        %v571 = vpack.c.b16 %v553, %v551
        %v572 = vpack.c.b16 %v554, %v552
        %v573 = vpack.c.b16 %v557, %v555
        %v574 = vpack.c.b16 %v558, %v556
        %591 = vmatpush.bf16.msra.mxu0 %v573
        %592 = vmatpush.bf16.msra.mxu0 %v571
        %593 = vmatpush.bf16.msra.mxu0 %v569
        %594 = vmatpush.bf16.msra.mxu0 %v567
        %595 = vmatpush.bf16.msra.mxu0 %v565
        %596 = vmatpush.bf16.msra.mxu0 %v563
        %597 = vmatpush.bf16.msra.mxu0 %v561
        %598 = vmatpush.bf16.msra.mxu0 %v559
        %599 = vmatmul.bf16.gmra.mxu0 %v494
        %v600 = vpop.f32.mrf.mxu0
        %v601 = vadd.f32 0.0, %v600
        %v602 = vpop.f32.mrf.mxu0
        %603 = vdwg.mxu0
        %604 = vmatpush.bf16.msra.mxu0 %v574
        %605 = vmatpush.bf16.msra.mxu0 %v572
        %606 = vmatpush.bf16.msra.mxu0 %v570
        %607 = vmatpush.bf16.msra.mxu0 %v568
        %608 = vmatpush.bf16.msra.mxu0 %v566
        %609 = vmatpush.bf16.msra.mxu0 %v564
        %610 = vmatpush.bf16.msra.mxu0 %v562
        %611 = vmatpush.bf16.msra.mxu0 %v560
        %612 = vmatmul.bf16.gmra.mxu0 %v494
        %v613 = vpop.f32.mrf.mxu0
        %v614 = vadd.f32 0.0, %v613
        %v615 = vpop.f32.mrf.mxu0
        %616 = vdwg.mxu0
        %v617 = vlaneseq
        %v618 = vand.u32 %v617, 127
        %v619 = vadd.s32 %v618, 128
        %s620 = smul.u32 %s26, 256
        %v621 = vstv %s620
        %v622 = vadd.s32 %v618, %v621
        %v623 = vadd.s32 %v619, %v621
        %v624 = vcvt.s32.f32 %v622
        %v625 = vcvt.s32.f32 %v623
        %v626 = vmax.f32 %v601, %v614
        %627 = vmax.xlane.f32.xlu0 %v626
        %v628 = vpop.xlane.xlu0 %627
        %vm629 = vcmp.eq.f32.partialorder %v601, %v628
        %vm630 = vcmp.eq.f32.partialorder %v614, %v628
        %v631 = vsel %vm629, %v624, 1e+09
        %v632 = vsel %vm630, %v625, 1e+09
        %v633 = vmin.f32 %v631, %v632
        %634 = vmin.xlane.f32.xlu0 %v633
        %v635 = vpop.xlane.xlu0 %634
        %v636 = vld [vmem:[#allocation3] sm:$0xff]
        %vm637 = vcmp.gt.f32.partialorder %v628, %v636
        %v638 = vld [vmem:[#allocation4] sm:$0xff]
        %v639 = vsel %vm637, %v635, %v638
        %vm640 = vcmask 7168
        %641 = vst.msk [vmem:[#allocation4] sm:$0xff] %vm640, %v639
        %v642 = vld [vmem:[#allocation3] sm:$0xff]
        %v643 = vsel %vm637, %v628, %v642
        %644 = vst.msk [vmem:[#allocation3] sm:$0xff] %vm640, %v643
        %v645 = vld [vmem:[%s376] sm:$0xff]
        %vm646 = vcmp.ne.f32.partialorder %v645, 0.0
        %v647 = vsel %vm646, %v645, 1.0
        %649 = vset.pattern.permute.xlu0 0
        %650 = vperm.xlu0 %649, %v647
        %v651 = vpop.permute.xlu0 %650
        %v653 = vrcp.pop %v651
        %v654 = vmul.f32 %v651, %v653
        %v655 = vsub.f32 1.0, %v654
        %v656 = vmul.f32 %v653, %v655
        %v657 = vadd.f32 %v653, %v656
        %vm658 = vweird.f32 %v651
        %vm659 = vweird.f32 %v653
        %vm660 = vmor %vm658, %vm659
        %v661 = vsel %vm660, %v653, %v657
        %v662 = vand.u32 2147483647, %v651
        %vm663 = vcmp.eq.f32.partialorder %v662, 8.507059e+37
        %v664 = vand.u32 %v651, 2147483648
        %v665 = vor.u32 1.1754944e-38, %v664
        %v666 = vsel %vm663, %v665, %v661
        %v667 = vmul.f32 %v601, %v666
        %v668 = vmul.f32 %v614, %v666
        %v671 = vrot.slane %v668, 7
        %vm672 = vcmask 1040384
        %v673 = vsel %vm672, %v667, %v671
        %vm674 = vcmask 1041409
        %v675 = vsel %vm674, %v667, %v671
        %v676 = vrot.slane %v675, 1
        %vm677 = vcmask 1042434
        %v678 = vsel %vm677, %v667, %v671
        %v679 = vrot.slane %v678, 2
        %vm680 = vcmask 1043459
        %v681 = vsel %vm680, %v667, %v671
        %v682 = vrot.slane %v681, 3
        %vm683 = vcmask 1044484
        %v684 = vsel %vm683, %v667, %v671
        %v685 = vrot.slane %v684, 4
        %vm686 = vcmask 1045509
        %v687 = vsel %vm686, %v667, %v671
        %v688 = vrot.slane %v687, 5
        %vm689 = vcmask 1046534
        %v690 = vsel %vm689, %v667, %v671
        %v691 = vrot.slane %v690, 6
        %vm692 = vcmask 1046528
        %v693 = vsel %vm692, %v671, %v667
        %v694 = vrot.slane %v693, 7
        %v695 = vld [vmem:[%s325] sm:$0xff]
        %v696 = vld [vmem:[%s325 + $0x8] sm:$0xff]
        %v697 = vld [vmem:[%s325 + $0x10] sm:$0xff]
        %v698 = vld [vmem:[%s325 + $0x18] sm:$0xff]
        %v699 = vld [vmem:[%s325 + $0x20] sm:$0xff]
        %v700 = vld [vmem:[%s325 + $0x28] sm:$0xff]
        %v701 = vld [vmem:[%s325 + $0x30] sm:$0xff]
        %v702 = vld [vmem:[%s325 + $0x38] sm:$0xff]
        %v703 = vperm.slane %v673, 0
        %v704 = vperm.slane %v673, 1
        %v705 = vperm.slane %v676, 0
        %v706 = vperm.slane %v676, 1
        %v707 = vperm.slane %v679, 0
        %v708 = vperm.slane %v679, 1
        %v709 = vperm.slane %v682, 0
        %v710 = vperm.slane %v682, 1
        %v711 = vperm.slane %v685, 0
        %v712 = vperm.slane %v685, 1
        %v713 = vperm.slane %v688, 0
        %v714 = vperm.slane %v688, 1
        %v715 = vperm.slane %v691, 0
        %v716 = vperm.slane %v691, 1
        %v717 = vperm.slane %v694, 0
        %v718 = vperm.slane %v694, 1
        %743 = vst [vmem:[#allocation1] ss:$2 sm:$0xff] %v695
        %v744 = vld.sshfl [vmem:[#allocation1] sm:$0xff pattern:$0x75316420]
        %v745 = vld.sshfl [vmem:[#allocation1 + $0x8] sm:$0xff pattern:$0x75316420]
        %s746 = scalar_lea.vmem [#allocation1], 16
        %747 = vst [vmem:[%s746] ss:$2 sm:$0xff] %v696
        %v748 = vld.sshfl [vmem:[#allocation1 + $0x10] sm:$0xff pattern:$0x75316420]
        %v749 = vld.sshfl [vmem:[#allocation1 + $0x18] sm:$0xff pattern:$0x75316420]
        %s750 = scalar_lea.vmem [#allocation1], 32
        %751 = vst [vmem:[%s750] ss:$2 sm:$0xff] %v697
        %v752 = vld.sshfl [vmem:[#allocation1 + $0x20] sm:$0xff pattern:$0x75316420]
        %v753 = vld.sshfl [vmem:[#allocation1 + $0x28] sm:$0xff pattern:$0x75316420]
        %s754 = scalar_lea.vmem [#allocation1], 48
        %755 = vst [vmem:[%s754] ss:$2 sm:$0xff] %v698
        %v756 = vld.sshfl [vmem:[#allocation1 + $0x30] sm:$0xff pattern:$0x75316420]
        %v757 = vld.sshfl [vmem:[#allocation1 + $0x38] sm:$0xff pattern:$0x75316420]
        %758 = vst [vmem:[#allocation1] ss:$2 sm:$0xff] %v699
        %v759 = vld.sshfl [vmem:[#allocation1] sm:$0xff pattern:$0x75316420]
        %v760 = vld.sshfl [vmem:[#allocation1 + $0x8] sm:$0xff pattern:$0x75316420]
        %761 = vst [vmem:[%s746] ss:$2 sm:$0xff] %v700
        %v762 = vld.sshfl [vmem:[#allocation1 + $0x10] sm:$0xff pattern:$0x75316420]
        %v763 = vld.sshfl [vmem:[#allocation1 + $0x18] sm:$0xff pattern:$0x75316420]
        %764 = vst [vmem:[%s750] ss:$2 sm:$0xff] %v701
        %v765 = vld.sshfl [vmem:[#allocation1 + $0x20] sm:$0xff pattern:$0x75316420]
        %v766 = vld.sshfl [vmem:[#allocation1 + $0x28] sm:$0xff pattern:$0x75316420]
        %767 = vst [vmem:[%s754] ss:$2 sm:$0xff] %v702
        %v768 = vld.sshfl [vmem:[#allocation1 + $0x30] sm:$0xff pattern:$0x75316420]
        %v769 = vld.sshfl [vmem:[#allocation1 + $0x38] sm:$0xff pattern:$0x75316420]
        %v786 = vadd.f32 %v703, %v744
        %v787 = vadd.f32 %v704, %v745
        %v788 = vadd.f32 %v705, %v748
        %v789 = vadd.f32 %v706, %v749
        %v790 = vadd.f32 %v707, %v752
        %v791 = vadd.f32 %v708, %v753
        %v792 = vadd.f32 %v709, %v756
        %v793 = vadd.f32 %v710, %v757
        %v794 = vadd.f32 %v711, %v759
        %v795 = vadd.f32 %v712, %v760
        %v796 = vadd.f32 %v713, %v762
        %v797 = vadd.f32 %v714, %v763
        %v798 = vadd.f32 %v715, %v765
        %v799 = vadd.f32 %v716, %v766
        %v800 = vadd.f32 %v717, %v768
        %v801 = vadd.f32 %v718, %v769
        %vm802 = vcmask 1043456
        %v803 = vsel %vm802, %v786, -inf
        %v804 = vsel %vm802, %v787, -inf
        %v805 = vmax.f32 %v803, %v804
        %806 = vmax.xlane.f32.xlu0 %v805
        %v807 = vpop.xlane.xlu0 %806
        %v808 = vsel %vm802, %v788, -inf
        %v809 = vsel %vm802, %v789, -inf
        %v810 = vmax.f32 %v808, %v809
        %811 = vmax.xlane.f32.xlu0 %v810
        %v812 = vpop.xlane.xlu0 %811
        %v813 = vsel %vm802, %v790, -inf
        %v814 = vsel %vm802, %v791, -inf
        %v815 = vmax.f32 %v813, %v814
        %816 = vmax.xlane.f32.xlu0 %v815
        %v817 = vpop.xlane.xlu0 %816
        %v818 = vsel %vm802, %v792, -inf
        %v819 = vsel %vm802, %v793, -inf
        %v820 = vmax.f32 %v818, %v819
        %821 = vmax.xlane.f32.xlu0 %v820
        %v822 = vpop.xlane.xlu0 %821
        %v823 = vsel %vm802, %v794, -inf
        %v824 = vsel %vm802, %v795, -inf
        %v825 = vmax.f32 %v823, %v824
        %826 = vmax.xlane.f32.xlu0 %v825
        %v827 = vpop.xlane.xlu0 %826
        %v828 = vsel %vm802, %v796, -inf
        %v829 = vsel %vm802, %v797, -inf
        %v830 = vmax.f32 %v828, %v829
        %831 = vmax.xlane.f32.xlu0 %v830
        %v832 = vpop.xlane.xlu0 %831
        %v833 = vsel %vm802, %v798, -inf
        %v834 = vsel %vm802, %v799, -inf
        %v835 = vmax.f32 %v833, %v834
        %836 = vmax.xlane.f32.xlu0 %v835
        %v837 = vpop.xlane.xlu0 %836
        %v838 = vsel %vm802, %v800, -inf
        %v839 = vsel %vm802, %v801, -inf
        %v840 = vmax.f32 %v838, %v839
        %841 = vmax.xlane.f32.xlu0 %v840
        %v842 = vpop.xlane.xlu0 %841
        %vm843 = vcmp.eq.f32.partialorder %v786, %v807
        %vm844 = vcmp.eq.f32.partialorder %v787, %v807
        %vm845 = vcmp.eq.f32.partialorder %v788, %v812
        %vm846 = vcmp.eq.f32.partialorder %v789, %v812
        %vm847 = vcmp.eq.f32.partialorder %v790, %v817
        %vm848 = vcmp.eq.f32.partialorder %v791, %v817
        %vm849 = vcmp.eq.f32.partialorder %v792, %v822
        %vm850 = vcmp.eq.f32.partialorder %v793, %v822
        %vm851 = vcmp.eq.f32.partialorder %v794, %v827
        %vm852 = vcmp.eq.f32.partialorder %v795, %v827
        %vm853 = vcmp.eq.f32.partialorder %v796, %v832
        %vm854 = vcmp.eq.f32.partialorder %v797, %v832
        %vm855 = vcmp.eq.f32.partialorder %v798, %v837
        %vm856 = vcmp.eq.f32.partialorder %v799, %v837
        %vm857 = vcmp.eq.f32.partialorder %v800, %v842
        %vm858 = vcmp.eq.f32.partialorder %v801, %v842
        %v861 = vrot.slane %v625, 7
        %v862 = vsel %vm672, %v624, %v861
        %v863 = vsel %vm674, %v624, %v861
        %v864 = vrot.slane %v863, 1
        %v865 = vsel %vm677, %v624, %v861
        %v866 = vrot.slane %v865, 2
        %v867 = vsel %vm680, %v624, %v861
        %v868 = vrot.slane %v867, 3
        %v869 = vsel %vm683, %v624, %v861
        %v870 = vrot.slane %v869, 4
        %v871 = vsel %vm686, %v624, %v861
        %v872 = vrot.slane %v871, 5
        %v873 = vsel %vm689, %v624, %v861
        %v874 = vrot.slane %v873, 6
        %v875 = vsel %vm692, %v861, %v624
        %v876 = vrot.slane %v875, 7
        %v877 = vperm.slane %v862, 0
        %v878 = vperm.slane %v862, 1
        %v879 = vperm.slane %v864, 0
        %v880 = vperm.slane %v864, 1
        %v881 = vperm.slane %v866, 0
        %v882 = vperm.slane %v866, 1
        %v883 = vperm.slane %v868, 0
        %v884 = vperm.slane %v868, 1
        %v885 = vperm.slane %v870, 0
        %v886 = vperm.slane %v870, 1
        %v887 = vperm.slane %v872, 0
        %v888 = vperm.slane %v872, 1
        %v889 = vperm.slane %v874, 0
        %v890 = vperm.slane %v874, 1
        %v891 = vperm.slane %v876, 0
        %v892 = vperm.slane %v876, 1
        %v909 = vsel %vm843, %v877, 1e+09
        %v910 = vsel %vm844, %v878, 1e+09
        %v911 = vsel %vm845, %v879, 1e+09
        %v912 = vsel %vm846, %v880, 1e+09
        %v913 = vsel %vm847, %v881, 1e+09
        %v914 = vsel %vm848, %v882, 1e+09
        %v915 = vsel %vm849, %v883, 1e+09
        %v916 = vsel %vm850, %v884, 1e+09
        %v917 = vsel %vm851, %v885, 1e+09
        %v918 = vsel %vm852, %v886, 1e+09
        %v919 = vsel %vm853, %v887, 1e+09
        %v920 = vsel %vm854, %v888, 1e+09
        %v921 = vsel %vm855, %v889, 1e+09
        %v922 = vsel %vm856, %v890, 1e+09
        %v923 = vsel %vm857, %v891, 1e+09
        %v924 = vsel %vm858, %v892, 1e+09
        %v925 = vsel %vm802, %v909, inf
        %v926 = vsel %vm802, %v910, inf
        %v927 = vmin.f32 %v925, %v926
        %928 = vmin.xlane.f32.xlu0 %v927
        %v929 = vpop.xlane.xlu0 %928
        %v930 = vsel %vm802, %v911, inf
        %v931 = vsel %vm802, %v912, inf
        %v932 = vmin.f32 %v930, %v931
        %933 = vmin.xlane.f32.xlu0 %v932
        %v934 = vpop.xlane.xlu0 %933
        %v935 = vsel %vm802, %v913, inf
        %v936 = vsel %vm802, %v914, inf
        %v937 = vmin.f32 %v935, %v936
        %938 = vmin.xlane.f32.xlu0 %v937
        %v939 = vpop.xlane.xlu0 %938
        %v940 = vsel %vm802, %v915, inf
        %v941 = vsel %vm802, %v916, inf
        %v942 = vmin.f32 %v940, %v941
        %943 = vmin.xlane.f32.xlu0 %v942
        %v944 = vpop.xlane.xlu0 %943
        %v945 = vsel %vm802, %v917, inf
        %v946 = vsel %vm802, %v918, inf
        %v947 = vmin.f32 %v945, %v946
        %948 = vmin.xlane.f32.xlu0 %v947
        %v949 = vpop.xlane.xlu0 %948
        %v950 = vsel %vm802, %v919, inf
        %v951 = vsel %vm802, %v920, inf
        %v952 = vmin.f32 %v950, %v951
        %953 = vmin.xlane.f32.xlu0 %v952
        %v954 = vpop.xlane.xlu0 %953
        %v955 = vsel %vm802, %v921, inf
        %v956 = vsel %vm802, %v922, inf
        %v957 = vmin.f32 %v955, %v956
        %958 = vmin.xlane.f32.xlu0 %v957
        %v959 = vpop.xlane.xlu0 %958
        %v960 = vsel %vm802, %v923, inf
        %v961 = vsel %vm802, %v924, inf
        %v962 = vmin.f32 %v960, %v961
        %963 = vmin.xlane.f32.xlu0 %v962
        %v964 = vpop.xlane.xlu0 %963
        %v965 = vld [vmem:[#allocation5] sm:$0xf]
        %v966 = vld [vmem:[#allocation5 + $0x4] sm:$0xf]
        %v967 = vld [vmem:[#allocation5 + $0x8] sm:$0xf]
        %v968 = vld [vmem:[#allocation5 + $0xc] sm:$0xf]
        %v969 = vld [vmem:[#allocation5 + $0x10] sm:$0xf]
        %v970 = vld [vmem:[#allocation5 + $0x14] sm:$0xf]
        %v971 = vld [vmem:[#allocation5 + $0x18] sm:$0xf]
        %v972 = vld [vmem:[#allocation5 + $0x1c] sm:$0xf]
        %vm973 = vcmp.gt.f32.partialorder %v807, %v965
        %vm974 = vcmp.gt.f32.partialorder %v812, %v966
        %vm975 = vcmp.gt.f32.partialorder %v817, %v967
        %vm976 = vcmp.gt.f32.partialorder %v822, %v968
        %vm977 = vcmp.gt.f32.partialorder %v827, %v969
        %vm978 = vcmp.gt.f32.partialorder %v832, %v970
        %vm979 = vcmp.gt.f32.partialorder %v837, %v971
        %vm980 = vcmp.gt.f32.partialorder %v842, %v972
        %v981 = vld [vmem:[#allocation6] sm:$0xf]
        %v982 = vld [vmem:[#allocation6 + $0x4] sm:$0xf]
        %v983 = vld [vmem:[#allocation6 + $0x8] sm:$0xf]
        %v984 = vld [vmem:[#allocation6 + $0xc] sm:$0xf]
        %v985 = vld [vmem:[#allocation6 + $0x10] sm:$0xf]
        %v986 = vld [vmem:[#allocation6 + $0x14] sm:$0xf]
        %v987 = vld [vmem:[#allocation6 + $0x18] sm:$0xf]
        %v988 = vld [vmem:[#allocation6 + $0x1c] sm:$0xf]
        %v989 = vsel %vm973, %v929, %v981
        %v990 = vsel %vm974, %v934, %v982
        %v991 = vsel %vm975, %v939, %v983
        %v992 = vsel %vm976, %v944, %v984
        %v993 = vsel %vm977, %v949, %v985
        %v994 = vsel %vm978, %v954, %v986
        %v995 = vsel %vm979, %v959, %v987
        %v996 = vsel %vm980, %v964, %v988
        %vm997 = vcmask 3072
        %998 = vst.msk [vmem:[#allocation6] sm:$0xf] %vm997, %v989
        %999 = vst.msk [vmem:[#allocation6 + $0x4] sm:$0xf] %vm997, %v990
        %1000 = vst.msk [vmem:[#allocation6 + $0x8] sm:$0xf] %vm997, %v991
        %1001 = vst.msk [vmem:[#allocation6 + $0xc] sm:$0xf] %vm997, %v992
        %1002 = vst.msk [vmem:[#allocation6 + $0x10] sm:$0xf] %vm997, %v993
        %1003 = vst.msk [vmem:[#allocation6 + $0x14] sm:$0xf] %vm997, %v994
        %1004 = vst.msk [vmem:[#allocation6 + $0x18] sm:$0xf] %vm997, %v995
        %1005 = vst.msk [vmem:[#allocation6 + $0x1c] sm:$0xf] %vm997, %v996
        %v1006 = vld [vmem:[#allocation5] sm:$0xf]
        %v1007 = vld [vmem:[#allocation5 + $0x4] sm:$0xf]
        %v1008 = vld [vmem:[#allocation5 + $0x8] sm:$0xf]
        %v1009 = vld [vmem:[#allocation5 + $0xc] sm:$0xf]
        %v1010 = vld [vmem:[#allocation5 + $0x10] sm:$0xf]
        %v1011 = vld [vmem:[#allocation5 + $0x14] sm:$0xf]
        %v1012 = vld [vmem:[#allocation5 + $0x18] sm:$0xf]
        %v1013 = vld [vmem:[#allocation5 + $0x1c] sm:$0xf]
        %v1014 = vsel %vm973, %v807, %v1006
        %v1015 = vsel %vm974, %v812, %v1007
        %v1016 = vsel %vm975, %v817, %v1008
        %v1017 = vsel %vm976, %v822, %v1009
        %v1018 = vsel %vm977, %v827, %v1010
        %v1019 = vsel %vm978, %v832, %v1011
        %v1020 = vsel %vm979, %v837, %v1012
        %v1021 = vsel %vm980, %v842, %v1013
        %1022 = vst.msk [vmem:[#allocation5] sm:$0xf] %vm997, %v1014
        %1023 = vst.msk [vmem:[#allocation5 + $0x4] sm:$0xf] %vm997, %v1015
        %1024 = vst.msk [vmem:[#allocation5 + $0x8] sm:$0xf] %vm997, %v1016
        %1025 = vst.msk [vmem:[#allocation5 + $0xc] sm:$0xf] %vm997, %v1017
        %1026 = vst.msk [vmem:[#allocation5 + $0x10] sm:$0xf] %vm997, %v1018
        %1027 = vst.msk [vmem:[#allocation5 + $0x14] sm:$0xf] %vm997, %v1019
        %1028 = vst.msk [vmem:[#allocation5 + $0x18] sm:$0xf] %vm997, %v1020
        %1029 = vst.msk [vmem:[#allocation5 + $0x1c] sm:$0xf] %vm997, %v1021
        %p1030 = scmp.eq.s32.totalorder %s26, 1
        // Predicated region
        $region61: #{tpu_custom_call.1} parent=43 // pred_check
          %p1031 = pneg %p1030
        $region62: #{tpu_custom_call.1} parent=43 // pred_check_branch
          %1033 = sbr.rel (%p1031) target = $region64
        $region63: #{tpu_custom_call.1} parent=43 // pred_region
          %v1034 = vld [vmem:[#allocation4] sm:$0xff]
          %v1036 = vrot.slane %v1034, 1
          %v1037 = vrot.slane %v1034, 2
          %v1038 = vrot.slane %v1034, 3
          %v1039 = vrot.slane %v1034, 4
          %v1040 = vrot.slane %v1034, 5
          %v1041 = vrot.slane %v1034, 6
          %v1042 = vrot.slane %v1034, 7
          %v1043 = vld [vmem:[%s376] sm:$0xff]
          %v1045 = vrot.slane %v1043, 1
          %v1046 = vrot.slane %v1043, 2
          %v1047 = vrot.slane %v1043, 3
          %v1048 = vrot.slane %v1043, 4
          %v1049 = vrot.slane %v1043, 5
          %v1050 = vrot.slane %v1043, 6
          %v1051 = vrot.slane %v1043, 7
          %vm1059 = vcmp.ne.f32.partialorder %v1043, 0.0
          %vm1060 = vcmp.ne.f32.partialorder %v1045, 0.0
          %vm1061 = vcmp.ne.f32.partialorder %v1046, 0.0
          %vm1062 = vcmp.ne.f32.partialorder %v1047, 0.0
          %vm1063 = vcmp.ne.f32.partialorder %v1048, 0.0
          %vm1064 = vcmp.ne.f32.partialorder %v1049, 0.0
          %vm1065 = vcmp.ne.f32.partialorder %v1050, 0.0
          %vm1066 = vcmp.ne.f32.partialorder %v1051, 0.0
          %v1067 = vld [vmem:[#allocation6] sm:$0xf]
          %v1068 = vld [vmem:[#allocation6 + $0x4] sm:$0xf]
          %v1069 = vld [vmem:[#allocation6 + $0x8] sm:$0xf]
          %v1070 = vld [vmem:[#allocation6 + $0xc] sm:$0xf]
          %v1071 = vld [vmem:[#allocation6 + $0x10] sm:$0xf]
          %v1072 = vld [vmem:[#allocation6 + $0x14] sm:$0xf]
          %v1073 = vld [vmem:[#allocation6 + $0x18] sm:$0xf]
          %v1074 = vld [vmem:[#allocation6 + $0x1c] sm:$0xf]
          %v1075 = vsel %vm1059, 1, 0
          %v1076 = vsel %vm1060, 1, 0
          %v1077 = vsel %vm1061, 1, 0
          %v1078 = vsel %vm1062, 1, 0
          %v1079 = vsel %vm1063, 1, 0
          %v1080 = vsel %vm1064, 1, 0
          %v1081 = vsel %vm1065, 1, 0
          %v1082 = vsel %vm1066, 1, 0
          %v1083 = vperm.slane %v1075, 0
          %v1084 = vperm.slane %v1076, 0
          %v1085 = vperm.slane %v1077, 0
          %v1086 = vperm.slane %v1078, 0
          %v1087 = vperm.slane %v1079, 0
          %v1088 = vperm.slane %v1080, 0
          %v1089 = vperm.slane %v1081, 0
          %v1090 = vperm.slane %v1082, 0
          %vm1091 = vcmp.eq.s32.totalorder %v1083, 1
          %vm1092 = vcmp.eq.s32.totalorder %v1084, 1
          %vm1093 = vcmp.eq.s32.totalorder %v1085, 1
          %vm1094 = vcmp.eq.s32.totalorder %v1086, 1
          %vm1095 = vcmp.eq.s32.totalorder %v1087, 1
          %vm1096 = vcmp.eq.s32.totalorder %v1088, 1
          %vm1097 = vcmp.eq.s32.totalorder %v1089, 1
          %vm1098 = vcmp.eq.s32.totalorder %v1090, 1
          %v1099 = vperm.slane %v1034, 0
          %v1100 = vperm.slane %v1036, 0
          %v1101 = vperm.slane %v1037, 0
          %v1102 = vperm.slane %v1038, 0
          %v1103 = vperm.slane %v1039, 0
          %v1104 = vperm.slane %v1040, 0
          %v1105 = vperm.slane %v1041, 0
          %v1106 = vperm.slane %v1042, 0
          %v1115 = vsel %vm1091, %v1067, %v1099
          %v1116 = vsel %vm1092, %v1068, %v1100
          %v1117 = vsel %vm1093, %v1069, %v1101
          %v1118 = vsel %vm1094, %v1070, %v1102
          %v1119 = vsel %vm1095, %v1071, %v1103
          %v1120 = vsel %vm1096, %v1072, %v1104
          %v1121 = vsel %vm1097, %v1073, %v1105
          %v1122 = vsel %vm1098, %v1074, %v1106
          %v1123 = vcvt.f32.s32.to.zero.pseudo %v1115
          %v1124 = vcvt.f32.s32.to.zero.pseudo %v1116
          %v1125 = vcvt.f32.s32.to.zero.pseudo %v1117
          %v1126 = vcvt.f32.s32.to.zero.pseudo %v1118
          %v1127 = vcvt.f32.s32.to.zero.pseudo %v1119
          %v1128 = vcvt.f32.s32.to.zero.pseudo %v1120
          %v1129 = vcvt.f32.s32.to.zero.pseudo %v1121
          %v1130 = vcvt.f32.s32.to.zero.pseudo %v1122
          %1131 = vst.msk [vmem:[%s383] sm:$0xf] %vm997, %v1123
          %1132 = vst.msk [vmem:[%s383 + $0x4] sm:$0xf] %vm997, %v1124
          %1133 = vst.msk [vmem:[%s383 + $0x8] sm:$0xf] %vm997, %v1125
          %1134 = vst.msk [vmem:[%s383 + $0xc] sm:$0xf] %vm997, %v1126
          %1135 = vst.msk [vmem:[%s383 + $0x10] sm:$0xf] %vm997, %v1127
          %1136 = vst.msk [vmem:[%s383 + $0x14] sm:$0xf] %vm997, %v1128
          %1137 = vst.msk [vmem:[%s383 + $0x18] sm:$0xf] %vm997, %v1129
          %1138 = vst.msk [vmem:[%s383 + $0x1c] sm:$0xf] %vm997, %v1130
        $region64: #{tpu_custom_call.1} parent=43 // pred_fallthru
          _
        %s1139 = smul.u32 8, %s25
        %p1140 = scmp.lt.s32.totalorder %s1139, 7
        %s1141 = scalar_select %p1140, %s1139, 7
        %s1142 = smul.addr %s1141, 4
        %s1143 = scalar_lea.vmem %s6, %s1142
        // Predicated region
        $region65: #{tpu_custom_call.1} parent=43 // pred_check
          %p1144 = pneg %p199
        $region66: #{tpu_custom_call.1} parent=43 // pred_check_branch
          %1146 = sbr.rel (%p1144) target = $region68
        $region67: #{tpu_custom_call.1} parent=43 // pred_region
          %s1147 = smul.u32 8, %s25
        $region68: #{tpu_custom_call.1} parent=43 // pred_fallthru
          _
        // Predicated region
        $region69: #{tpu_custom_call.1} parent=43 // pred_check
          %p1148 = pneg %p199
        $region70: #{tpu_custom_call.1} parent=43 // pred_check_branch
          %1150 = sbr.rel (%p1148) target = $region72
        $region71: #{tpu_custom_call.1} parent=43 // pred_region
          %s1151 = smul.u32 8, %s25
          %p1152 = scmp.lt.s32.totalorder %s1151, 7
          %s1153 = scalar_select %p1152, %s1151, 7
          %s1154 = smul.addr %s1153, 4
          %s1155 = scalar_lea.vmem %s6, %s1154
        $region72: #{tpu_custom_call.1} parent=43 // pred_fallthru
          _
      $region44: #{tpu_custom_call.1} parent=5 // pred_fallthru
        _
      %p1156 = scmp.le.s32.totalorder 2, %s16
      // Predicated region
      $region73: #{tpu_custom_call.1} parent=5 // pred_check
        %p1157 = pneg %p1156
      $region74: #{tpu_custom_call.1} parent=5 // pred_check_branch
        %1159 = sbr.rel (%p1157) target = $region76
      $region75: #{tpu_custom_call.1} parent=5 // pred_region
        %s1160 = ssub.s32 %s16, 2
      $region76: #{tpu_custom_call.1} parent=5 // pred_fallthru
        _
    $region6: #{tpu_custom_call.1} parent=1 // loop_footer
      %s20 = sadd.s32 1, %s16
    $region7: #{tpu_custom_call.1} parent=1 // loop_footer_branch
      %15 = sbr.rel target = $region3
    $region8: #{tpu_custom_call.1} parent=1 // loop_exit
      _
    %1161 = vsyncpa [#allocation8], 1
    %s1162 = scalar_lea.sflag [#allocation8], 1
    %1163 = vsyncpa %s1162, 1
    %1164 = vsyncpa [#allocation10], 1
    %s1165 = scalar_lea.sflag [#allocation10], 1
    %1166 = vsyncpa %s1165, 1

</llo_original>
